<compile_context>
chip_gen: v5e
topology: v5e:2x2
jax: 0.10.0
libtpu: 0.0.40
codegen_flags: <defaults>
</compile_context>

<pallas_src>
import jax
import jax.numpy as jnp
from jax.experimental import pallas as pl
from jax.experimental.pallas import tpu as pltpu


def _identity_kernel(x_ref, o_ref):
    # Pure pass-through on a lane-dense (rows, 128) slab.
    o_ref[...] = x_ref[...]


def null_model_forward(x):
    """Exact semantic + performance match of Null_Model.forward: a no-op.

    Emits zero XLA ops: no pallas_call, no copy, no block_until_ready.
    """
    del x
    return None


@jax.jit
def identity_demo(x):
    """Demo-only Pallas identity copy (not used by null_model_forward)."""
    lanes = 128
    rows = x.size // lanes  # 2*4*16*16 = 2048 = 16 * 128 -> lane-dense slab
    x2d = x.reshape(rows, lanes)
    y2d = pl.pallas_call(
        _identity_kernel,
        out_shape=jax.ShapeDtypeStruct((rows, lanes), x.dtype),
        in_specs=[pl.BlockSpec(memory_space=pltpu.VMEM)],
        out_specs=pl.BlockSpec(memory_space=pltpu.VMEM),
        input_output_aliases={0: 0},  # output aliases input buffer
    )(x2d)
    return y2d.reshape(x.shape)


if __name__ == "__main__":
    key = jax.random.PRNGKey(0)
    # Small NCHW input consistent with a typical t2i image tensor.
    x = jax.random.normal(key, (2, 4, 16, 16), dtype=jnp.float32)

    # Run the demo Pallas kernel once and block on its result.
    y = jax.block_until_ready(identity_demo(x))

    # Sanity: identity copy must round-trip exactly.
    assert y.shape == x.shape and y.dtype == x.dtype
    assert bool(jnp.all(y == x))

    # Semantic forward of Null_Model: pure no-op, returns None, zero device
    # work and zero host-device synchronization.
    out = null_model_forward(x)
    assert out is None

    print("KERNEL_OK")
</pallas_src>

<mosaic_0001>
module attributes {stable_mosaic.version = 11 : i64} {
  func.func @_identity_kernel(%arg0: memref<16x128xf32, #tpu.memory_space<vmem>>, %arg1: memref<16x128xf32, #tpu.memory_space<vmem>>) attributes {dimension_semantics = [], scalar_prefetch = 0 : i64, scratch_operands = 0 : i64, tpu.core_type = #tpu.core_type<tc>} {
    %c0 = arith.constant 0 : index
    %c0_0 = arith.constant 0 : index
    %0 = vector.load %arg0[%c0, %c0_0] : memref<16x128xf32, #tpu.memory_space<vmem>>, vector<16x128xf32>
    %c0_1 = arith.constant 0 : index
    %c0_2 = arith.constant 0 : index
    %1 = vector.load %arg1[%c0_1, %c0_2] : memref<16x128xf32, #tpu.memory_space<vmem>>, vector<16x128xf32>
    tpu.vector_store %arg1[%c0_1, %c0_2], %0 {strides = array<i32>} : memref<16x128xf32, #tpu.memory_space<vmem>>, vector<16x128xf32>,
    return
  }
}

</mosaic_0001>

<llo_original>
// kernel: identity_demo.1
$region0: #{identity_demo.1}
  #allocation0 [shape = 'u32[]', space=smem, size = 0x4, offset = 0x4, fixed_abs, tag = 'smem constant byte address 0x4 - core index']
  #allocation1 [shape = 'u32[72,128]{1,0:T(1,128)}', space=vmem, size = 0x9000, scoped, tag = 'internal scratch']
  %s0 = inlined_call_operand.vmem [shape: f32[16,128], index: 0, kind: input, shape index: {}, may-alias: {0,1}]
  %s1 = inlined_call_operand.vmem [shape: f32[16,128], index: 1, kind: output, shape index: {}, may-alias: {0,1}]
  %s2 = sld [smem:[#allocation0]]
  $region14: #{identity_demo.1} parent=0
    _
  %s4 = ssub.s32 1, %s2
  %s5 = scalar_select 0, %s4, %s2
  // Predicated region
  $region2: #{identity_demo.1} parent=0 // pred_check
    _
  $region3: #{identity_demo.1} parent=0 // pred_check_branch
    %7 = sbr.rel (0) target = $region5
  $region4: #{identity_demo.1} parent=0 // pred_region
    _
  $region5: #{identity_demo.1} parent=0 // pred_fallthru
    _
  %v8 = vld [vmem:[%s0] sm:$0xff]
  %v9 = vld [vmem:[%s0 + $0x8] sm:$0xff]
  %10 = vst [vmem:[%s1] sm:$0xff] %v8
  %11 = vst [vmem:[%s1 + $0x8] sm:$0xff] %v9
  // Predicated region
  $region6: #{identity_demo.1} parent=0 // pred_check
    _
  $region7: #{identity_demo.1} parent=0 // pred_check_branch
    %13 = sbr.rel (0) target = $region9
  $region8: #{identity_demo.1} parent=0 // pred_region
    _
  $region9: #{identity_demo.1} parent=0 // pred_fallthru
    _
  // Predicated region
  $region10: #{identity_demo.1} parent=0 // pred_check
    _
  $region11: #{identity_demo.1} parent=0 // pred_check_branch
    %15 = sbr.rel (0) target = $region13
  $region12: #{identity_demo.1} parent=0 // pred_region
    _
  $region13: #{identity_demo.1} parent=0 // pred_fallthru
    _

</llo_original>
